<compile_context>
chip_gen: v6e
topology: v6e:2x2x1
jax: 0.10.0
libtpu: 0.0.40
codegen_flags: <defaults>
</compile_context>

<pallas_src>
import functools
import math

import jax
import jax.numpy as jnp
from jax import lax
from jax.experimental import pallas as pl
from jax.experimental.pallas import tpu as pltpu

T_REDUCE = 1
TIMESTEP = 2.5
MAX_1 = T_REDUCE / TIMESTEP        # 0.4
SPIKE_THR = MAX_1 - 0.001          # 0.399 : catCuda.getSpikes threshold

CFG_O_LOW = [(128, 1, 6.8658), (128, 1, 0.8518), 'M',
             (256, 1, 1.5976), (256, 1, 0.8886), 'M',
             (512, 1, 1.714), (512, 1, 0.6957), 'M',
             (1024, 0, 1.7274), 'M']


# ---------------------------------------------------------------------------
# Kernel 1: tiled matmul + bias (+ optional scale / spike threshold epilogue).
# Used for every conv layer (via im2col) and for the classifier dense layer.
# ---------------------------------------------------------------------------
def _matmul_bias_act_kernel(x_ref, w_ref, b_ref, o_ref, acc_ref, *,
                            threshold, out_scale):
    k = pl.program_id(2)

    @pl.when(k == 0)
    def _init():
        acc_ref[...] = jnp.zeros_like(acc_ref)

    acc_ref[...] += jnp.dot(x_ref[...], w_ref[...],
                            preferred_element_type=jnp.float32)

    @pl.when(k == pl.num_programs(2) - 1)
    def _finalize():
        y = acc_ref[...] + b_ref[...]
        if out_scale != 1.0:                      # static (Python float)
            y = y * out_scale
        if threshold is None:                     # static
            o_ref[...] = y.astype(o_ref.dtype)
        else:
            # IF neuron with a single timestep: spike iff y >= threshold.
            o_ref[...] = jnp.where(y >= threshold, 1.0, 0.0).astype(o_ref.dtype)


def _pick_tile(dim, unit, cap):
    """Largest divisor of `dim` that is a multiple of `unit` and <= cap,
    else the full dim (a full dim is always a legal block extent)."""
    best = None
    t = unit
    while t <= min(dim, cap):
        if dim % t == 0:
            best = t
        t += unit
    return best if best is not None else dim


def matmul_bias_act(x, w, b, *, threshold=None, out_scale=1.0):
    """(M,K) @ (K,N) + b, optionally scaled and thresholded to {0,1} spikes."""
    m, k = x.shape
    k2, n = w.shape
    assert k == k2 and b.shape == (n,)
    tm = _pick_tile(m, 8, 256)
    tk = _pick_tile(k, 128, 512)
    tn = _pick_tile(n, 128, 512)
    grid = (m // tm, n // tn, k // tk)
    kernel = functools.partial(
        _matmul_bias_act_kernel,
        threshold=None if threshold is None else float(threshold),
        out_scale=float(out_scale))
    return pl.pallas_call(
        kernel,
        out_shape=jax.ShapeDtypeStruct((m, n), jnp.float32),
        grid_spec=pltpu.PrefetchScalarGridSpec(
            num_scalar_prefetch=0,
            grid=grid,
            in_specs=[
                pl.BlockSpec((tm, tk), lambda i, j, kk: (i, kk)),
                pl.BlockSpec((tk, tn), lambda i, j, kk: (kk, j)),
                pl.BlockSpec((1, tn), lambda i, j, kk: (0, j)),
            ],
            out_specs=pl.BlockSpec((tm, tn), lambda i, j, kk: (i, j)),
            scratch_shapes=[pltpu.VMEM((tm, tn), jnp.float32)],
        ),
        compiler_params=pltpu.CompilerParams(
            dimension_semantics=("parallel", "parallel", "arbitrary")),
    )(x, w, b.reshape(1, n))


def conv3x3_bias_spike(x, w, b, *, padding, threshold):
    """catSNN snn.conv (3x3, stride 1) + NewSpike_low, T=1, NHWC layout."""
    n, h, wdim, cin = x.shape
    cout = w.shape[-1]
    if padding:
        x = jnp.pad(x, ((0, 0), (padding, padding), (padding, padding), (0, 0)))
    hp, wp = h + 2 * padding, wdim + 2 * padding
    ho, wo = hp - 2, wp - 2
    # im2col: 9 shifted views concatenated along channels (layout plumbing only;
    # the conv itself is a single MXU matmul with fused bias+spike epilogue).
    taps = [x[:, dy:dy + ho, dx:dx + wo, :] for dy in range(3) for dx in range(3)]
    patches = jnp.concatenate(taps, axis=-1).reshape(n * ho * wo, 9 * cin)
    w2 = w.reshape(9 * cin, cout)
    y = matmul_bias_act(patches, w2, b, threshold=threshold)
    return y.reshape(n, ho, wo, cout)


# ---------------------------------------------------------------------------
# Kernel 2: 2x2 average pool + spike threshold (snn.pool(2) + NewSpike).
# ---------------------------------------------------------------------------
def _avgpool2x2_spike_kernel(top_ref, bot_ref, o_ref, *, c, threshold):
    top = top_ref[...]                  # (1, Ho, 1, Wo, 2c): even input rows
    bot = bot_ref[...]                  # (1, Ho, 1, Wo, 2c): odd  input rows
    s = top[..., :c] + top[..., c:] + bot[..., :c] + bot[..., c:]
    y = s * 0.25                        # average pooling over the 2x2 window
    o_ref[...] = jnp.where(y >= threshold, 1.0, 0.0).astype(o_ref.dtype)


def avgpool2x2_spike(x, *, threshold):
    n, h, w, c = x.shape
    ho, wo = h // 2, w // 2
    # Free, contiguous relabeling: (N,H,W,C) -> (N,H/2,2,W/2,2C).
    xr = x.reshape(n, ho, 2, wo, 2 * c)
    kernel = functools.partial(_avgpool2x2_spike_kernel, c=c,
                               threshold=float(threshold))
    blk_in = (1, ho, 1, wo, 2 * c)
    out5 = pl.pallas_call(
        kernel,
        out_shape=jax.ShapeDtypeStruct((n, ho, 1, wo, c), x.dtype),
        grid_spec=pltpu.PrefetchScalarGridSpec(
            num_scalar_prefetch=0,
            grid=(n,),
            in_specs=[pl.BlockSpec(blk_in, lambda i: (i, 0, 0, 0, 0)),
                      pl.BlockSpec(blk_in, lambda i: (i, 0, 1, 0, 0))],
            out_specs=pl.BlockSpec((1, ho, 1, wo, c),
                                   lambda i: (i, 0, 0, 0, 0)),
        ),
        compiler_params=pltpu.CompilerParams(
            dimension_semantics=("parallel",)),
    )(xr, xr)
    return out5.reshape(n, ho, wo, c)


# ---------------------------------------------------------------------------
# The full model (mirrors CatVGG_o_low('o_low', T=1) forward).
# ---------------------------------------------------------------------------
class CatVGGOLowPallas:

    def __init__(self, T=T_REDUCE, *, key):
        if T != 1:
            raise NotImplementedError("Only T = T_reduce = 1 is supported.")
        self.T = T
        n_conv = sum(1 for item in CFG_O_LOW if item != 'M')
        keys = jax.random.split(key, n_conv + 1)
        self.layers = []
        cin = 3
        ki = 0
        for item in CFG_O_LOW:
            if item == 'M':
                self.layers.append(('pool', SPIKE_THR))
            else:
                cout, pad, thr_scale = item
                kw, kb = jax.random.split(keys[ki]); ki += 1
                bound = 1.0 / math.sqrt(cin * 9)
                wgt = jax.random.uniform(kw, (3, 3, cin, cout), jnp.float32,
                                         -bound, bound)
                bias = jax.random.uniform(kb, (cout,), jnp.float32,
                                          -bound, bound)
                self.layers.append(
                    ('conv', wgt, bias, pad, SPIKE_THR / thr_scale))
                cin = cout
        kw, kb = jax.random.split(keys[-1])
        bound = 1.0 / math.sqrt(1024)
        self.w_cls = jax.random.uniform(kw, (1024, 10), jnp.float32,
                                        -bound, bound)
        self.b_cls = jax.random.uniform(kb, (10,), jnp.float32, -bound, bound)

    def __call__(self, x):
        # x: (N, 3, H, W, T) spike tensor (same layout as the PyTorch module).
        assert x.shape[-1] == self.T
        n = x.shape[0]
        h = jnp.transpose(x[..., 0], (0, 2, 3, 1))        # NCHW -> NHWC
        for layer in self.layers:
            if layer[0] == 'conv':
                _, wgt, bias, pad, thr = layer
                h = conv3x3_bias_spike(h, wgt, bias, padding=pad, threshold=thr)
            else:                                          # 'M': pool + NewSpike
                h = avgpool2x2_spike(h, threshold=layer[1])
        feat = h.reshape(n, -1)                            # (N, 1024)
        # classifier1 (dense) followed by sum_spikes()/T (identity for T=1).
        logits = matmul_bias_act(feat, self.w_cls, self.b_cls,
                                 threshold=None, out_scale=1.0 / self.T)
        return logits.reshape(n, 10, 1, 1)                 # matches torch shape


if __name__ == "__main__":
    root = jax.random.PRNGKey(0)
    k_in, k_params, k_chk = jax.random.split(root, 3)

    # CIFAR-10-shaped spike input (the 'o_low' cfg requires 32x32 to reach
    # the 1x1x1024 feature map the classifier expects): (2, 3, 32, 32, T=1).
    batch = 2
    x = (jax.random.uniform(k_in, (batch, 3, 32, 32, 1)) < 0.5
         ).astype(jnp.float32)

    model = CatVGGOLowPallas(T=T_REDUCE, key=k_params)
    out = jax.block_until_ready(model(x))
    assert out.shape == (batch, 10, 1, 1), out.shape
    assert bool(jnp.all(jnp.isfinite(out)))

    # ----- kernel-level correctness checks (deterministic / tolerance-safe) ---
    ka, kb, kc, kd, ke = jax.random.split(k_chk, 5)

    # 1) matmul + bias kernel (no spike) vs plain jnp.
    a = jax.random.normal(ka, (128, 384), jnp.float32)
    wt = jax.random.normal(kb, (384, 256), jnp.float32) / math.sqrt(384.0)
    bt = jax.random.normal(kc, (256,), jnp.float32)
    got = matmul_bias_act(a, wt, bt, threshold=None)
    want = a @ wt + bt
    assert bool(jnp.allclose(got, want, rtol=2e-2, atol=2e-2))

    # 2) conv + spike vs lax.conv reference; integer-valued weights/inputs make
    #    the comparison exact (no threshold-edge flakiness from MXU rounding).
    xi = (jax.random.uniform(kd, (2, 8, 8, 128)) < 0.5).astype(jnp.float32)
    wi = jnp.round(jax.random.uniform(ke, (3, 3, 128, 128), jnp.float32,
                                      -1.0, 2.0))
    bi = jnp.zeros((128,), jnp.float32)
    got = conv3x3_bias_spike(xi, wi, bi, padding=1, threshold=0.5)
    ref = lax.conv_general_dilated(
        xi, wi, (1, 1), [(1, 1), (1, 1)],
        dimension_numbers=('NHWC', 'HWIO', 'NHWC')) + bi
    ref = (ref >= 0.5).astype(jnp.float32)
    assert bool(jnp.array_equal(got, ref))

    # 3) pool + spike vs jnp reference (exact on {0,1} inputs).
    sp = (jax.random.uniform(ka, (2, 16, 16, 128)) < 0.3).astype(jnp.float32)
    gotp = avgpool2x2_spike(sp, threshold=SPIKE_THR)
    refp = (sp.reshape(2, 8, 2, 8, 2, 128).mean(axis=(2, 4)) >= SPIKE_THR
            ).astype(jnp.float32)
    assert bool(jnp.array_equal(gotp, refp))

    print("KERNEL_OK")
</pallas_src>

<mosaic_0001>
module attributes {stable_mosaic.version = 11 : i64} {
  func.func @_matmul_bias_act_kernel(%arg0: i32, %arg1: i32, %arg2: i32, %arg3: memref<256x27xf32, #tpu.memory_space<vmem>>, %arg4: memref<27x128xf32, #tpu.memory_space<vmem>>, %arg5: memref<1x128xf32, #tpu.memory_space<vmem>>, %arg6: memref<256x128xf32, #tpu.memory_space<vmem>>, %arg7: memref<256x128xf32, #tpu.memory_space<vmem>>) attributes {dimension_semantics = [#tpu.dimension_semantics<parallel>, #tpu.dimension_semantics<parallel>, #tpu.dimension_semantics<arbitrary>], iteration_bounds = array<i64: 8, 1, 1>, scalar_prefetch = 0 : i64, scratch_operands = 1 : i64, tpu.core_type = #tpu.core_type<tc>, window_params = [{transform_indices = @transform_0, window_bounds = array<i64: 256, 27>}, {transform_indices = @transform_1, window_bounds = array<i64: 27, 128>}, {transform_indices = @transform_2, window_bounds = array<i64: 1, 128>}, {transform_indices = @transform_3, window_bounds = array<i64: 256, 128>}]} {
    %c0_i32 = arith.constant 0 : i32
    %0 = arith.cmpi eq, %arg2, %c0_i32 : i32
    %1 = arith.extui %0 : i1 to i32
    %c0_i32_0 = arith.constant 0 : i32
    %2 = arith.cmpi ne, %1, %c0_i32_0 : i32
    scf.if %2 {
      %cst_10 = arith.constant 0.000000e+00 : f32
      %12 = vector.broadcast %cst_10 : f32 to vector<256x128xf32>
      %c0_11 = arith.constant 0 : index
      %c0_12 = arith.constant 0 : index
      %13 = vector.load %arg7[%c0_11, %c0_12] : memref<256x128xf32, #tpu.memory_space<vmem>>, vector<256x128xf32>
      tpu.vector_store %arg7[%c0_11, %c0_12], %12 {strides = array<i32>} : memref<256x128xf32, #tpu.memory_space<vmem>>, vector<256x128xf32>,
    } else {
    }
    %c0 = arith.constant 0 : index
    %c0_1 = arith.constant 0 : index
    %3 = vector.load %arg7[%c0, %c0_1] : memref<256x128xf32, #tpu.memory_space<vmem>>, vector<256x128xf32>
    %c0_2 = arith.constant 0 : index
    %c0_3 = arith.constant 0 : index
    %4 = vector.load %arg3[%c0_2, %c0_3] : memref<256x27xf32, #tpu.memory_space<vmem>>, vector<256x27xf32>
    %c0_4 = arith.constant 0 : index
    %c0_5 = arith.constant 0 : index
    %5 = vector.load %arg4[%c0_4, %c0_5] : memref<27x128xf32, #tpu.memory_space<vmem>>, vector<27x128xf32>
    %cst = arith.constant dense<0.000000e+00> : vector<256x128xf32>
    %6 = tpu.matmul %4, %5, %cst {dimension_numbers = #tpu.dot_dimension_numbers<[1], [0], [0], [1], [0, 0, 1, 1], [], []>} : vector<256x27xf32>, vector<27x128xf32>, vector<256x128xf32> -> vector<256x128xf32>
    %7 = arith.addf %3, %6 : vector<256x128xf32>
    %c0_6 = arith.constant 0 : index
    %c0_7 = arith.constant 0 : index
    %8 = vector.load %arg7[%c0_6, %c0_7] : memref<256x128xf32, #tpu.memory_space<vmem>>, vector<256x128xf32>
    tpu.vector_store %arg7[%c0_6, %c0_7], %7 {strides = array<i32>} : memref<256x128xf32, #tpu.memory_space<vmem>>, vector<256x128xf32>,
    %c0_i32_8 = arith.constant 0 : i32
    %9 = arith.cmpi eq, %arg2, %c0_i32_8 : i32
    %10 = arith.extui %9 : i1 to i32
    %c0_i32_9 = arith.constant 0 : i32
    %11 = arith.cmpi ne, %10, %c0_i32_9 : i32
    scf.if %11 {
      %c0_10 = arith.constant 0 : index
      %c0_11 = arith.constant 0 : index
      %12 = vector.load %arg7[%c0_10, %c0_11] : memref<256x128xf32, #tpu.memory_space<vmem>>, vector<256x128xf32>
      %c0_12 = arith.constant 0 : index
      %c0_13 = arith.constant 0 : index
      %13 = vector.load %arg5[%c0_12, %c0_13] : memref<1x128xf32, #tpu.memory_space<vmem>>, vector<1x128xf32>
      %14 = vector.broadcast %13 : vector<1x128xf32> to vector<256x128xf32>
      %15 = arith.addf %12, %14 : vector<256x128xf32>
      %cst_14 = arith.constant 0.05811413 : f32
      %16 = vector.broadcast %cst_14 : f32 to vector<256x128xf32>
      %17 = arith.cmpf oge, %15, %16 : vector<256x128xf32>
      %cst_15 = arith.constant 1.000000e+00 : f32
      %cst_16 = arith.constant 0.000000e+00 : f32
      %18 = vector.broadcast %cst_15 : f32 to vector<256x128xf32>
      %19 = vector.broadcast %cst_16 : f32 to vector<256x128xf32>
      %20 = arith.select %17, %18, %19 : vector<256x128xi1>, vector<256x128xf32>
      %c0_17 = arith.constant 0 : index
      %c0_18 = arith.constant 0 : index
      %21 = vector.load %arg6[%c0_17, %c0_18] : memref<256x128xf32, #tpu.memory_space<vmem>>, vector<256x128xf32>
      tpu.vector_store %arg6[%c0_17, %c0_18], %20 {strides = array<i32>} : memref<256x128xf32, #tpu.memory_space<vmem>>, vector<256x128xf32>,
    } else {
    }
    return
  }
  func.func @transform_0(%arg0: i32, %arg1: i32, %arg2: i32) -> (i32, i32) {
    %c0_i32 = arith.constant 0 : i32
    return %arg0, %arg2 : i32, i32
  }
  func.func @transform_1(%arg0: i32, %arg1: i32, %arg2: i32) -> (i32, i32) {
    %c0_i32 = arith.constant 0 : i32
    return %arg2, %arg1 : i32, i32
  }
  func.func @transform_2(%arg0: i32, %arg1: i32, %arg2: i32) -> (i32, i32) {
    %c0_i32 = arith.constant 0 : i32
    %c0_i32_0 = arith.constant 0 : i32
    return %c0_i32, %arg1 : i32, i32
  }
  func.func @transform_3(%arg0: i32, %arg1: i32, %arg2: i32) -> (i32, i32) {
    %c0_i32 = arith.constant 0 : i32
    return %arg0, %arg1 : i32, i32
  }
}

</mosaic_0001>

<llo_original>
// kernel: tpu_custom_call.1
$region0: #{tpu_custom_call.1}
  #allocation0 [shape = 'u32[]', space=smem, size = 0x4, offset = 0x4, fixed_abs, tag = 'smem constant byte address 0x4 - core index']
  #allocation1 [shape = 'u32[144,128]{1,0:T(1,128)}', space=vmem, size = 0x12000, scoped, tag = 'internal scratch']
  #allocation2 [shape = 'f32[256,128]{1,0:T(8,128)}', space=vmem, size = 0x20000, scoped, tag = 'scratch operand']
  %s0 = inlined_call_operand.vmem [shape: f32[2048,27], index: 0, kind: input, shape index: {}]
  %s1 = inlined_call_operand.vmem [shape: f32[27,128], index: 1, kind: input, shape index: {}]
  %s2 = inlined_call_operand.vmem [shape: f32[1,128], index: 2, kind: input, shape index: {}]
  %s3 = inlined_call_operand.hbm [shape: f32[2048,128], index: 3, kind: output, shape index: {}]
  %s4 = sld [smem:[#allocation0]]
  $region53: #{tpu_custom_call.1} parent=0
    _
  %s6 = ssub.s32 1, %s4
  %s7 = scalar_select 0, %s6, %s4
  $region1: #{tpu_custom_call.1} parent=0
    #allocation3 [shape = 'u8[262144]{0}', space=vmem, size = 0x40000, scoped, tag = 'output window, operand 0']
    #allocation4 [shape = 's32[2]{0}', space=sflag, size = 0x8, scoped, tag = 'scoped memory for tpu_custom_call.1']
    %8 = vsyncpa [#allocation4], 0
    %s9 = scalar_lea.sflag [#allocation4], 1
    %10 = vsyncpa %s9, 0
    loop: start=0, step=1, limit=10
    $region2: #{tpu_custom_call.1} parent=1 // loop_pre_header
      _
    $region3: #{tpu_custom_call.1} parent=1 // loop_header
      %s12 = sphi 0, %s16
      %p13 = scmp.ge.s32.totalorder %s12, 10
      %s19 = sphi 0, %s38
      %s20 = sphi 0, %s34
      %s21 = sphi 0, %s30
      %s22 = sphi 0, %s19
      %s23 = sphi 0, %s20
      %s24 = sphi 0, %s21
      %s25 = sphi 0, %s22
      %s26 = sphi 0, %s23
      %s27 = sphi 0, %s24
      %s43 = sphi 0, %s45
      %s46 = sphi 0, %s43
      %s47 = sphi 0, %s46
      %s63 = sphi 0, %s47
      %s71 = sphi 0, %s73
      %s74 = sphi 0, %s71
      %s75 = sphi 0, %s74
      %s91 = sphi 0, %s75
      %s97 = sphi 0, %s99
      %s100 = sphi 0, %s97
      %s101 = sphi 0, %s100
      %s117 = sphi 0, %s101
      %s125 = sphi 0, %s127
      %s128 = sphi 0, %s125
      %s129 = sphi 0, %s128
      %s145 = sphi 0, %s129
    $region4: #{tpu_custom_call.1} parent=1 // loop_header_branch
      %15 = sbr.rel (%p13) target = $region8
    $region5: #{tpu_custom_call.1} parent=1 // loop_body
      %s17 = ssub.s32 %s12, 1
      %s18 = ssub.s32 %s12, 2
      %s28 = sadd.s32 1, %s21
      %p29 = scmp.ge.s32.totalorder %s28, 1
      %s30 = scalar_select %p29, 0, %s28
      %s31 = sadd.s32 1, %s20
      %s32 = scalar_select %p29, %s31, %s20
      %p33 = scmp.ge.s32.totalorder %s32, 1
      %s34 = scalar_select %p33, 0, %s32
      %s35 = sadd.s32 1, %s19
      %s36 = scalar_select %p33, %s35, %s19
      %p37 = scmp.ge.s32.totalorder %s36, 8
      %s38 = scalar_select %p37, 0, %s36
      %s39 = ssub.s32 %s19, %s38
      %s40 = ssub.s32 %s21, %s30
      %s41 = sor.u32 %s39, %s40
      %p42 = scmp.eq.s32.totalorder %s41, 0
      %s44 = sadd.s32 %s43, 1
      %s45 = scalar_select %p42, %s43, %s44
      %p48 = pneg %p42
      %p49 = scmp.eq.s32.totalorder %s12, 7
      %p50 = por %p48, %p49
      %p51 = scmp.ne.s32.totalorder %s43, %s46
      %p52 = scmp.eq.s32.totalorder %s12, 0
      %p53 = por %p51, %p52
      %p54 = scmp.ne.s32.totalorder %s43, %s46
      %p55 = scmp.eq.s32.totalorder %s17, 7
      %p56 = por %p54, %p55
      %p57 = scmp.ne.s32.totalorder %s46, %s47
      %p58 = scmp.eq.s32.totalorder %s17, 0
      %p59 = por %p57, %p58
      %p60 = scmp.ne.s32.totalorder %s46, %s47
      %p61 = scmp.eq.s32.totalorder %s18, 7
      %p62 = por %p60, %p61
      %p64 = scmp.ne.s32.totalorder %s47, %s63
      %p65 = scmp.eq.s32.totalorder %s18, 0
      %p66 = por %p64, %p65
      %s67 = ssub.s32 %s21, %s30
      %s68 = ssub.s32 %s20, %s34
      %s69 = sor.u32 %s67, %s68
      %p70 = scmp.eq.s32.totalorder %s69, 0
      %s72 = sadd.s32 %s71, 1
      %s73 = scalar_select %p70, %s71, %s72
      %p76 = pneg %p70
      %p77 = scmp.eq.s32.totalorder %s12, 7
      %p78 = por %p76, %p77
      %p79 = scmp.ne.s32.totalorder %s71, %s74
      %p80 = scmp.eq.s32.totalorder %s12, 0
      %p81 = por %p79, %p80
      %p82 = scmp.ne.s32.totalorder %s71, %s74
      %p83 = scmp.eq.s32.totalorder %s17, 7
      %p84 = por %p82, %p83
      %p85 = scmp.ne.s32.totalorder %s74, %s75
      %p86 = scmp.eq.s32.totalorder %s17, 0
      %p87 = por %p85, %p86
      %p88 = scmp.ne.s32.totalorder %s74, %s75
      %p89 = scmp.eq.s32.totalorder %s18, 7
      %p90 = por %p88, %p89
      %p92 = scmp.ne.s32.totalorder %s75, %s91
      %p93 = scmp.eq.s32.totalorder %s18, 0
      %p94 = por %p92, %p93
      %s95 = ssub.s32 %s20, %s34
      %p96 = scmp.eq.s32.totalorder %s95, 0
      %s98 = sadd.s32 %s97, 1
      %s99 = scalar_select %p96, %s97, %s98
      %p102 = pneg %p96
      %p103 = scmp.eq.s32.totalorder %s12, 7
      %p104 = por %p102, %p103
      %p105 = scmp.ne.s32.totalorder %s97, %s100
      %p106 = scmp.eq.s32.totalorder %s12, 0
      %p107 = por %p105, %p106
      %p108 = scmp.ne.s32.totalorder %s97, %s100
      %p109 = scmp.eq.s32.totalorder %s17, 7
      %p110 = por %p108, %p109
      %p111 = scmp.ne.s32.totalorder %s100, %s101
      %p112 = scmp.eq.s32.totalorder %s17, 0
      %p113 = por %p111, %p112
      %p114 = scmp.ne.s32.totalorder %s100, %s101
      %p115 = scmp.eq.s32.totalorder %s18, 7
      %p116 = por %p114, %p115
      %p118 = scmp.ne.s32.totalorder %s101, %s117
      %p119 = scmp.eq.s32.totalorder %s18, 0
      %p120 = por %p118, %p119
      %s121 = ssub.s32 %s19, %s38
      %s122 = ssub.s32 %s20, %s34
      %s123 = sor.u32 %s121, %s122
      %p124 = scmp.eq.s32.totalorder %s123, 0
      %s126 = sadd.s32 %s125, 1
      %s127 = scalar_select %p124, %s125, %s126
      %p130 = pneg %p124
      %p131 = scmp.eq.s32.totalorder %s12, 7
      %p132 = por %p130, %p131
      %p133 = scmp.ne.s32.totalorder %s125, %s128
      %p134 = scmp.eq.s32.totalorder %s12, 0
      %p135 = por %p133, %p134
      %p136 = scmp.ne.s32.totalorder %s125, %s128
      %p137 = scmp.eq.s32.totalorder %s17, 7
      %p138 = por %p136, %p137
      %p139 = scmp.ne.s32.totalorder %s128, %s129
      %p140 = scmp.eq.s32.totalorder %s17, 0
      %p141 = por %p139, %p140
      %p142 = scmp.ne.s32.totalorder %s128, %s129
      %p143 = scmp.eq.s32.totalorder %s18, 7
      %p144 = por %p142, %p143
      %p146 = scmp.ne.s32.totalorder %s129, %s145
      %p147 = scmp.eq.s32.totalorder %s18, 0
      %p148 = por %p146, %p147
      %p149 = scmp.le.s32.totalorder 1, %s12
      %p150 = scmp.lt.s32.totalorder %s12, 9
      %p151 = pnand %p149, %p150
      %p152 = pneg %p151
      // Predicated region
      $region9: #{tpu_custom_call.1} parent=5 // pred_check
        _
      $region10: #{tpu_custom_call.1} parent=5 // pred_check_branch
        %154 = sbr.rel (%p151) target = $region12
      $region11: #{tpu_custom_call.1} parent=5 // pred_region
        %s155 = ssub.s32 %s12, 1
        // Predicated region
        $region13: #{tpu_custom_call.1} parent=11 // pred_check
          %p156 = pneg %p87
        $region14: #{tpu_custom_call.1} parent=11 // pred_check_branch
          %158 = sbr.rel (%p156) target = $region16
        $region15: #{tpu_custom_call.1} parent=11 // pred_region
          %s159 = smul.u32 4, %s24
          %p160 = scmp.lt.s32.totalorder %s159, 3
          %s161 = scalar_select %p160, %s159, 3
          %p162 = scmp.lt.s32.totalorder %s23, 0
          %s163 = scalar_select %p162, %s23, 0
          %s164 = sadd.s32 %s163, %s161
          %s165 = smul.addr %s164, 8
          %s166 = scalar_lea.vmem %s1, %s165
          %s167 = smul.u32 4, %s24
        $region16: #{tpu_custom_call.1} parent=11 // pred_fallthru
          _
        // Predicated region
        $region17: #{tpu_custom_call.1} parent=11 // pred_check
          %p168 = pneg %p113
        $region18: #{tpu_custom_call.1} parent=11 // pred_check_branch
          %170 = sbr.rel (%p168) target = $region20
        $region19: #{tpu_custom_call.1} parent=11 // pred_region
          %p171 = scmp.lt.s32.totalorder %s23, 0
          %s172 = scalar_select %p171, %s23, 0
          %s173 = scalar_lea.vmem %s2, %s172
        $region20: #{tpu_custom_call.1} parent=11 // pred_fallthru
          _
      $region12: #{tpu_custom_call.1} parent=5 // pred_fallthru
        _
      %p174 = scmp.lt.s32.totalorder %s12, 8
      // Predicated region
      $region21: #{tpu_custom_call.1} parent=5 // pred_check
        %p175 = pneg %p174
      $region22: #{tpu_custom_call.1} parent=5 // pred_check_branch
        %177 = sbr.rel (%p175) target = $region24
      $region23: #{tpu_custom_call.1} parent=5 // pred_region
        // Predicated region
        $region25: #{tpu_custom_call.1} parent=23 // pred_check
          %p178 = pneg %p53
        $region26: #{tpu_custom_call.1} parent=23 // pred_check_branch
          %180 = sbr.rel (%p178) target = $region28
        $region27: #{tpu_custom_call.1} parent=23 // pred_region
          %s181 = smul.u32 32, %s19
          %p182 = scmp.lt.s32.totalorder %s181, 255
          %s183 = scalar_select %p182, %s181, 255
          %p184 = scmp.lt.s32.totalorder %s21, 0
          %s185 = scalar_select %p184, %s21, 0
          %s186 = sadd.s32 %s185, %s183
          %s187 = smul.addr %s186, 8
          %s188 = scalar_lea.vmem %s0, %s187
          %s189 = smul.u32 32, %s19
        $region28: #{tpu_custom_call.1} parent=23 // pred_fallthru
          _
      $region24: #{tpu_custom_call.1} parent=5 // pred_fallthru
        _
      %p190 = scmp.le.s32.totalorder 1, %s12
      %p191 = scmp.lt.s32.totalorder %s12, 9
      %p192 = pnand %p190, %p191
      %p193 = pneg %p192
      // Predicated region
      $region29: #{tpu_custom_call.1} parent=5 // pred_check
        _
      $region30: #{tpu_custom_call.1} parent=5 // pred_check_branch
        %195 = sbr.rel (%p192) target = $region32
      $region31: #{tpu_custom_call.1} parent=5 // pred_region
        %s196 = ssub.s32 %s12, 1
        %s197 = smul.u32 32, %s22
        %p198 = scmp.lt.s32.totalorder %s197, 255
        %s199 = scalar_select %p198, %s197, 255
        %p200 = scmp.lt.s32.totalorder %s24, 0
        %s201 = scalar_select %p200, %s24, 0
        %s202 = sadd.s32 %s201, %s199
        %s203 = smul.addr %s202, 8
        %s204 = scalar_lea.vmem %s0, %s203
        %p205 = pneg %p59
        %p206 = pneg %p56
        %s207 = smul.u32 4, %s24
        %p208 = scmp.lt.s32.totalorder %s207, 3
        %s209 = scalar_select %p208, %s207, 3
        %p210 = scmp.lt.s32.totalorder %s23, 0
        %s211 = scalar_select %p210, %s23, 0
        %s212 = sadd.s32 %s211, %s209
        %s213 = smul.addr %s212, 8
        %s214 = scalar_lea.vmem %s1, %s213
        %p215 = pneg %p87
        %p216 = pneg %p84
        %p217 = scmp.lt.s32.totalorder %s23, 0
        %s218 = scalar_select %p217, %s23, 0
        %s219 = scalar_lea.vmem %s2, %s218
        %p220 = pneg %p113
        %p221 = pneg %p110
        %p222 = pneg %p141
        %p223 = pneg %p138
        %s224 = sand.u32 %s128, 1
        %s225 = scalar_lea.sflag [#allocation4], %s224
        %s226 = sand.u32 %s128, 1
        %s227 = smul.addr %s226, 256
        %s228 = scalar_lea.vmem [#allocation3], %s227
        %s229 = smul.u32 32, %s22
        %p230 = scmp.lt.s32.totalorder %s229, 255
        %s231 = scalar_select %p230, %s229, 255
        %p232 = scmp.lt.s32.totalorder %s24, 0
        %s233 = scalar_select %p232, %s24, 0
        %s234 = sadd.s32 %s233, %s231
        %s235 = smul.addr %s234, 8
        %s236 = scalar_lea.vmem %s0, %s235
        %s237 = smul.u32 32, %s22
        %s238 = smul.u32 4, %s24
        %p239 = scmp.lt.s32.totalorder %s238, 3
        %s240 = scalar_select %p239, %s238, 3
        %p241 = scmp.lt.s32.totalorder %s23, 0
        %s242 = scalar_select %p241, %s23, 0
        %s243 = sadd.s32 %s242, %s240
        %s244 = smul.addr %s243, 8
        %s245 = scalar_lea.vmem %s1, %s244
        %s246 = smul.u32 4, %s24
        %p247 = scmp.lt.s32.totalorder %s23, 0
        %s248 = scalar_select %p247, %s23, 0
        %s249 = scalar_lea.vmem %s2, %s248
        %s250 = smul.u32 32, %s22
        %p251 = scmp.eq.s32.totalorder %s24, 0
        // Predicated region
        $region33: #{tpu_custom_call.1} parent=31 // pred_check
          %p252 = pneg %p251
        $region34: #{tpu_custom_call.1} parent=31 // pred_check_branch
          %254 = sbr.rel (%p252) target = $region36
        $region35: #{tpu_custom_call.1} parent=31 // pred_region
          %255 = vst [vmem:[#allocation2] sm:$0xff] 0.0
          %256 = vst [vmem:[#allocation2 + $0x8] sm:$0xff] 0.0
          %257 = vst [vmem:[#allocation2 + $0x10] sm:$0xff] 0.0
          %258 = vst [vmem:[#allocation2 + $0x18] sm:$0xff] 0.0
          %259 = vst [vmem:[#allocation2 + $0x20] sm:$0xff] 0.0
          %260 = vst [vmem:[#allocation2 + $0x28] sm:$0xff] 0.0
          %261 = vst [vmem:[#allocation2 + $0x30] sm:$0xff] 0.0
          %262 = vst [vmem:[#allocation2 + $0x38] sm:$0xff] 0.0
          %263 = vst [vmem:[#allocation2 + $0x40] sm:$0xff] 0.0
          %264 = vst [vmem:[#allocation2 + $0x48] sm:$0xff] 0.0
          %265 = vst [vmem:[#allocation2 + $0x50] sm:$0xff] 0.0
          %266 = vst [vmem:[#allocation2 + $0x58] sm:$0xff] 0.0
          %267 = vst [vmem:[#allocation2 + $0x60] sm:$0xff] 0.0
          %268 = vst [vmem:[#allocation2 + $0x68] sm:$0xff] 0.0
          %269 = vst [vmem:[#allocation2 + $0x70] sm:$0xff] 0.0
          %270 = vst [vmem:[#allocation2 + $0x78] sm:$0xff] 0.0
          %271 = vst [vmem:[#allocation2 + $0x80] sm:$0xff] 0.0
          %272 = vst [vmem:[#allocation2 + $0x88] sm:$0xff] 0.0
          %273 = vst [vmem:[#allocation2 + $0x90] sm:$0xff] 0.0
          %274 = vst [vmem:[#allocation2 + $0x98] sm:$0xff] 0.0
          %275 = vst [vmem:[#allocation2 + $0xa0] sm:$0xff] 0.0
          %276 = vst [vmem:[#allocation2 + $0xa8] sm:$0xff] 0.0
          %277 = vst [vmem:[#allocation2 + $0xb0] sm:$0xff] 0.0
          %278 = vst [vmem:[#allocation2 + $0xb8] sm:$0xff] 0.0
          %279 = vst [vmem:[#allocation2 + $0xc0] sm:$0xff] 0.0
          %280 = vst [vmem:[#allocation2 + $0xc8] sm:$0xff] 0.0
          %281 = vst [vmem:[#allocation2 + $0xd0] sm:$0xff] 0.0
          %282 = vst [vmem:[#allocation2 + $0xd8] sm:$0xff] 0.0
          %283 = vst [vmem:[#allocation2 + $0xe0] sm:$0xff] 0.0
          %284 = vst [vmem:[#allocation2 + $0xe8] sm:$0xff] 0.0
          %285 = vst [vmem:[#allocation2 + $0xf0] sm:$0xff] 0.0
          %286 = vst [vmem:[#allocation2 + $0xf8] sm:$0xff] 0.0
        $region36: #{tpu_custom_call.1} parent=31 // pred_fallthru
          _
        %v287 = vld [vmem:[#allocation2] sm:$0xff]
        %v288 = vld [vmem:[#allocation2 + $0x8] sm:$0xff]
        %v289 = vld [vmem:[#allocation2 + $0x10] sm:$0xff]
        %v290 = vld [vmem:[#allocation2 + $0x18] sm:$0xff]
        %v291 = vld [vmem:[#allocation2 + $0x20] sm:$0xff]
        %v292 = vld [vmem:[#allocation2 + $0x28] sm:$0xff]
        %v293 = vld [vmem:[#allocation2 + $0x30] sm:$0xff]
        %v294 = vld [vmem:[#allocation2 + $0x38] sm:$0xff]
        %v295 = vld [vmem:[#allocation2 + $0x40] sm:$0xff]
        %v296 = vld [vmem:[#allocation2 + $0x48] sm:$0xff]
        %v297 = vld [vmem:[#allocation2 + $0x50] sm:$0xff]
        %v298 = vld [vmem:[#allocation2 + $0x58] sm:$0xff]
        %v299 = vld [vmem:[#allocation2 + $0x60] sm:$0xff]
        %v300 = vld [vmem:[#allocation2 + $0x68] sm:$0xff]
        %v301 = vld [vmem:[#allocation2 + $0x70] sm:$0xff]
        %v302 = vld [vmem:[#allocation2 + $0x78] sm:$0xff]
        %v303 = vld [vmem:[#allocation2 + $0x80] sm:$0xff]
        %v304 = vld [vmem:[#allocation2 + $0x88] sm:$0xff]
        %v305 = vld [vmem:[#allocation2 + $0x90] sm:$0xff]
        %v306 = vld [vmem:[#allocation2 + $0x98] sm:$0xff]
        %v307 = vld [vmem:[#allocation2 + $0xa0] sm:$0xff]
        %v308 = vld [vmem:[#allocation2 + $0xa8] sm:$0xff]
        %v309 = vld [vmem:[#allocation2 + $0xb0] sm:$0xff]
        %v310 = vld [vmem:[#allocation2 + $0xb8] sm:$0xff]
        %v311 = vld [vmem:[#allocation2 + $0xc0] sm:$0xff]
        %v312 = vld [vmem:[#allocation2 + $0xc8] sm:$0xff]
        %v313 = vld [vmem:[#allocation2 + $0xd0] sm:$0xff]
        %v314 = vld [vmem:[#allocation2 + $0xd8] sm:$0xff]
        %v315 = vld [vmem:[#allocation2 + $0xe0] sm:$0xff]
        %v316 = vld [vmem:[#allocation2 + $0xe8] sm:$0xff]
        %v317 = vld [vmem:[#allocation2 + $0xf0] sm:$0xff]
        %v318 = vld [vmem:[#allocation2 + $0xf8] sm:$0xff]
        %v319 = vld [vmem:[%s236] sm:$0xff]
        %v320 = vld [vmem:[%s236 + $0x8] sm:$0xff]
        %v321 = vld [vmem:[%s236 + $0x10] sm:$0xff]
        %v322 = vld [vmem:[%s236 + $0x18] sm:$0xff]
        %v323 = vld [vmem:[%s236 + $0x20] sm:$0xff]
        %v324 = vld [vmem:[%s236 + $0x28] sm:$0xff]
        %v325 = vld [vmem:[%s236 + $0x30] sm:$0xff]
        %v326 = vld [vmem:[%s236 + $0x38] sm:$0xff]
        %v327 = vld [vmem:[%s236 + $0x40] sm:$0xff]
        %v328 = vld [vmem:[%s236 + $0x48] sm:$0xff]
        %v329 = vld [vmem:[%s236 + $0x50] sm:$0xff]
        %v330 = vld [vmem:[%s236 + $0x58] sm:$0xff]
        %v331 = vld [vmem:[%s236 + $0x60] sm:$0xff]
        %v332 = vld [vmem:[%s236 + $0x68] sm:$0xff]
        %v333 = vld [vmem:[%s236 + $0x70] sm:$0xff]
        %v334 = vld [vmem:[%s236 + $0x78] sm:$0xff]
        %v335 = vld [vmem:[%s236 + $0x80] sm:$0xff]
        %v336 = vld [vmem:[%s236 + $0x88] sm:$0xff]
        %v337 = vld [vmem:[%s236 + $0x90] sm:$0xff]
        %v338 = vld [vmem:[%s236 + $0x98] sm:$0xff]
        %v339 = vld [vmem:[%s236 + $0xa0] sm:$0xff]
        %v340 = vld [vmem:[%s236 + $0xa8] sm:$0xff]
        %v341 = vld [vmem:[%s236 + $0xb0] sm:$0xff]
        %v342 = vld [vmem:[%s236 + $0xb8] sm:$0xff]
        %v343 = vld [vmem:[%s236 + $0xc0] sm:$0xff]
        %v344 = vld [vmem:[%s236 + $0xc8] sm:$0xff]
        %v345 = vld [vmem:[%s236 + $0xd0] sm:$0xff]
        %v346 = vld [vmem:[%s236 + $0xd8] sm:$0xff]
        %v347 = vld [vmem:[%s236 + $0xe0] sm:$0xff]
        %v348 = vld [vmem:[%s236 + $0xe8] sm:$0xff]
        %v349 = vld [vmem:[%s236 + $0xf0] sm:$0xff]
        %v350 = vld [vmem:[%s236 + $0xf8] sm:$0xff]
        %v351 = vld [vmem:[%s245] sm:$0xff]
        %v352 = vld [vmem:[%s245 + $0x8] sm:$0xff]
        %v353 = vld [vmem:[%s245 + $0x10] sm:$0xff]
        %v354 = vld [vmem:[%s245 + $0x18] sm:$0x7]
        %vm355 = vcmask 220160
        %v357 = vsel %vm355, %v319, 0
        %v360 = vsel %vm355, %v320, 0
        %v363 = vsel %vm355, %v321, 0
        %v366 = vsel %vm355, %v322, 0
        %v369 = vsel %vm355, %v323, 0
        %v372 = vsel %vm355, %v324, 0
        %v375 = vsel %vm355, %v325, 0
        %v378 = vsel %vm355, %v326, 0
        %v381 = vsel %vm355, %v327, 0
        %v384 = vsel %vm355, %v328, 0
        %v387 = vsel %vm355, %v329, 0
        %v390 = vsel %vm355, %v330, 0
        %v393 = vsel %vm355, %v331, 0
        %v396 = vsel %vm355, %v332, 0
        %v399 = vsel %vm355, %v333, 0
        %v402 = vsel %vm355, %v334, 0
        %v405 = vsel %vm355, %v335, 0
        %v408 = vsel %vm355, %v336, 0
        %v411 = vsel %vm355, %v337, 0
        %v414 = vsel %vm355, %v338, 0
        %v417 = vsel %vm355, %v339, 0
        %v420 = vsel %vm355, %v340, 0
        %v423 = vsel %vm355, %v341, 0
        %v426 = vsel %vm355, %v342, 0
        %v429 = vsel %vm355, %v343, 0
        %v432 = vsel %vm355, %v344, 0
        %v435 = vsel %vm355, %v345, 0
        %v438 = vsel %vm355, %v346, 0
        %v441 = vsel %vm355, %v347, 0
        %v444 = vsel %vm355, %v348, 0
        %v447 = vsel %vm355, %v349, 0
        %v450 = vsel %vm355, %v350, 0
        %vm452 = vcmask 1042432
        %v454 = vsel %vm452, %v354, 0
        %456 = vmatprep.subr.mxu0 0.0
        %457 = vmatpush1.msra.mxu0 0.0
        %458 = vmatprep.subr.mxu0 0.0
        %459 = vmatpush1.msra.mxu0 0.0
        %460 = vmatprep.subr.mxu0 0.0
        %461 = vmatpush1.msra.mxu0 0.0
        %462 = vmatprep.subr.mxu0 0.0
        %463 = vmatpush1.msra.mxu0 0.0
        %464 = vmatprep.subr.mxu0 0.0
        %465 = vmatpush1.msra.mxu0 0.0
        %466 = vmatprep.subr.mxu0 0.0
        %467 = vmatpush1.msra.mxu0 0.0
        %468 = vmatprep.subr.mxu0 0.0
        %469 = vmatpush1.msra.mxu0 0.0
        %470 = vmatprep.subr.mxu0 0.0
        %471 = vmatpush1.msra.mxu0 0.0
        %472 = vmatprep.subr.mxu0 0.0
        %473 = vmatpush1.msra.mxu0 0.0
        %474 = vmatprep.subr.mxu0 0.0
        %475 = vmatpush1.msra.mxu0 0.0
        %476 = vmatprep.subr.mxu0 0.0
        %477 = vmatpush1.msra.mxu0 0.0
        %478 = vmatprep.subr.mxu0 0.0
        %479 = vmatpush1.msra.mxu0 0.0
        %480 = vmatprep.subr.mxu0 0.0
        %481 = vmatpush1.msra.mxu0 %v454
        %482 = vmatprep.subr.mxu0 0.0
        %483 = vmatpush1.msra.mxu0 %v353
        %484 = vmatprep.subr.mxu0 0.0
        %485 = vmatpush1.msra.mxu0 %v352
        %486 = vmatprep.subr.mxu0 0.0
        %487 = vmatpush1.msra.mxu0 %v351
        %488 = vmatprep.subr.mxu0 0.0
        %489 = vmatpush2.msra.mxu0 0.0
        %490 = vmatprep.subr.mxu0 0.0
        %491 = vmatpush2.msra.mxu0 0.0
        %492 = vmatprep.subr.mxu0 0.0
        %493 = vmatpush2.msra.mxu0 0.0
        %494 = vmatprep.subr.mxu0 0.0
        %495 = vmatpush2.msra.mxu0 0.0
        %496 = vmatprep.subr.mxu0 0.0
        %497 = vmatpush2.msra.mxu0 0.0
        %498 = vmatprep.subr.mxu0 0.0
        %499 = vmatpush2.msra.mxu0 0.0
        %500 = vmatprep.subr.mxu0 0.0
        %501 = vmatpush2.msra.mxu0 0.0
        %502 = vmatprep.subr.mxu0 0.0
        %503 = vmatpush2.msra.mxu0 0.0
        %504 = vmatprep.subr.mxu0 0.0
        %505 = vmatpush2.msra.mxu0 0.0
        %506 = vmatprep.subr.mxu0 0.0
        %507 = vmatpush2.msra.mxu0 0.0
        %508 = vmatprep.subr.mxu0 0.0
        %509 = vmatpush2.msra.mxu0 0.0
        %510 = vmatprep.subr.mxu0 0.0
        %511 = vmatpush2.msra.mxu0 0.0
        %512 = vmatprep.subr.mxu0 0.0
        %513 = vmatpush2.msra.mxu0 0.0
        %514 = vmatprep.subr.mxu0 0.0
        %515 = vmatpush2.msra.mxu0 0.0
        %516 = vmatprep.subr.mxu0 0.0
        %517 = vmatpush2.msra.mxu0 0.0
        %518 = vmatprep.subr.mxu0 0.0
        %519 = vmatpush2.msra.mxu0 0.0
        %520 = vmatprep.mubr.f32.mxu0 0.0
        %521 = vmatmul.mubr.f32.gmra.mxu0 %v357
        %v522 = vpop.f32.mrf.mxu0
        %v523 = vadd.f32 0.0, %v522
        %v524 = vpop.f32.mrf.mxu0
        %525 = vmatprep.mubr.f32.mxu0 0.0
        %526 = vmatmul.mubr.f32.gmra.mxu0 %v360
        %v527 = vpop.f32.mrf.mxu0
        %v528 = vadd.f32 0.0, %v527
        %v529 = vpop.f32.mrf.mxu0
        %530 = vmatprep.mubr.f32.mxu0 0.0
        %531 = vmatmul.mubr.f32.gmra.mxu0 %v363
        %v532 = vpop.f32.mrf.mxu0
        %v533 = vadd.f32 0.0, %v532
        %v534 = vpop.f32.mrf.mxu0
        %535 = vmatprep.mubr.f32.mxu0 0.0
        %536 = vmatmul.mubr.f32.gmra.mxu0 %v366
        %v537 = vpop.f32.mrf.mxu0
        %v538 = vadd.f32 0.0, %v537
        %v539 = vpop.f32.mrf.mxu0
        %540 = vmatprep.mubr.f32.mxu0 0.0
        %541 = vmatmul.mubr.f32.gmra.mxu0 %v369
        %v542 = vpop.f32.mrf.mxu0
        %v543 = vadd.f32 0.0, %v542
        %v544 = vpop.f32.mrf.mxu0
        %545 = vmatprep.mubr.f32.mxu0 0.0
        %546 = vmatmul.mubr.f32.gmra.mxu0 %v372
        %v547 = vpop.f32.mrf.mxu0
        %v548 = vadd.f32 0.0, %v547
        %v549 = vpop.f32.mrf.mxu0
        %550 = vmatprep.mubr.f32.mxu0 0.0
        %551 = vmatmul.mubr.f32.gmra.mxu0 %v375
        %v552 = vpop.f32.mrf.mxu0
        %v553 = vadd.f32 0.0, %v552
        %v554 = vpop.f32.mrf.mxu0
        %555 = vmatprep.mubr.f32.mxu0 0.0
        %556 = vmatmul.mubr.f32.gmra.mxu0 %v378
        %v557 = vpop.f32.mrf.mxu0
        %v558 = vadd.f32 0.0, %v557
        %v559 = vpop.f32.mrf.mxu0
        %560 = vmatprep.mubr.f32.mxu0 0.0
        %561 = vmatmul.mubr.f32.gmra.mxu0 %v381
        %v562 = vpop.f32.mrf.mxu0
        %v563 = vadd.f32 0.0, %v562
        %v564 = vpop.f32.mrf.mxu0
        %565 = vmatprep.mubr.f32.mxu0 0.0
        %566 = vmatmul.mubr.f32.gmra.mxu0 %v384
        %v567 = vpop.f32.mrf.mxu0
        %v568 = vadd.f32 0.0, %v567
        %v569 = vpop.f32.mrf.mxu0
        %570 = vmatprep.mubr.f32.mxu0 0.0
        %571 = vmatmul.mubr.f32.gmra.mxu0 %v387
        %v572 = vpop.f32.mrf.mxu0
        %v573 = vadd.f32 0.0, %v572
        %v574 = vpop.f32.mrf.mxu0
        %575 = vmatprep.mubr.f32.mxu0 0.0
        %576 = vmatmul.mubr.f32.gmra.mxu0 %v390
        %v577 = vpop.f32.mrf.mxu0
        %v578 = vadd.f32 0.0, %v577
        %v579 = vpop.f32.mrf.mxu0
        %580 = vmatprep.mubr.f32.mxu0 0.0
        %581 = vmatmul.mubr.f32.gmra.mxu0 %v393
        %v582 = vpop.f32.mrf.mxu0
        %v583 = vadd.f32 0.0, %v582
        %v584 = vpop.f32.mrf.mxu0
        %585 = vmatprep.mubr.f32.mxu0 0.0
        %586 = vmatmul.mubr.f32.gmra.mxu0 %v396
        %v587 = vpop.f32.mrf.mxu0
        %v588 = vadd.f32 0.0, %v587
        %v589 = vpop.f32.mrf.mxu0
        %590 = vmatprep.mubr.f32.mxu0 0.0
        %591 = vmatmul.mubr.f32.gmra.mxu0 %v399
        %v592 = vpop.f32.mrf.mxu0
        %v593 = vadd.f32 0.0, %v592
        %v594 = vpop.f32.mrf.mxu0
        %595 = vmatprep.mubr.f32.mxu0 0.0
        %596 = vmatmul.mubr.f32.gmra.mxu0 %v402
        %v597 = vpop.f32.mrf.mxu0
        %v598 = vadd.f32 0.0, %v597
        %v599 = vpop.f32.mrf.mxu0
        %600 = vmatprep.mubr.f32.mxu0 0.0
        %601 = vmatmul.mubr.f32.gmra.mxu0 %v405
        %v602 = vpop.f32.mrf.mxu0
        %v603 = vadd.f32 0.0, %v602
        %v604 = vpop.f32.mrf.mxu0
        %605 = vmatprep.mubr.f32.mxu0 0.0
        %606 = vmatmul.mubr.f32.gmra.mxu0 %v408
        %v607 = vpop.f32.mrf.mxu0
        %v608 = vadd.f32 0.0, %v607
        %v609 = vpop.f32.mrf.mxu0
        %610 = vmatprep.mubr.f32.mxu0 0.0
        %611 = vmatmul.mubr.f32.gmra.mxu0 %v411
        %v612 = vpop.f32.mrf.mxu0
        %v613 = vadd.f32 0.0, %v612
        %v614 = vpop.f32.mrf.mxu0
        %615 = vmatprep.mubr.f32.mxu0 0.0
        %616 = vmatmul.mubr.f32.gmra.mxu0 %v414
        %v617 = vpop.f32.mrf.mxu0
        %v618 = vadd.f32 0.0, %v617
        %v619 = vpop.f32.mrf.mxu0
        %620 = vmatprep.mubr.f32.mxu0 0.0
        %621 = vmatmul.mubr.f32.gmra.mxu0 %v417
        %v622 = vpop.f32.mrf.mxu0
        %v623 = vadd.f32 0.0, %v622
        %v624 = vpop.f32.mrf.mxu0
        %625 = vmatprep.mubr.f32.mxu0 0.0
        %626 = vmatmul.mubr.f32.gmra.mxu0 %v420
        %v627 = vpop.f32.mrf.mxu0
        %v628 = vadd.f32 0.0, %v627
        %v629 = vpop.f32.mrf.mxu0
        %630 = vmatprep.mubr.f32.mxu0 0.0
        %631 = vmatmul.mubr.f32.gmra.mxu0 %v423
        %v632 = vpop.f32.mrf.mxu0
        %v633 = vadd.f32 0.0, %v632
        %v634 = vpop.f32.mrf.mxu0
        %635 = vmatprep.mubr.f32.mxu0 0.0
        %636 = vmatmul.mubr.f32.gmra.mxu0 %v426
        %v637 = vpop.f32.mrf.mxu0
        %v638 = vadd.f32 0.0, %v637
        %v639 = vpop.f32.mrf.mxu0
        %640 = vmatprep.mubr.f32.mxu0 0.0
        %641 = vmatmul.mubr.f32.gmra.mxu0 %v429
        %v642 = vpop.f32.mrf.mxu0
        %v643 = vadd.f32 0.0, %v642
        %v644 = vpop.f32.mrf.mxu0
        %645 = vmatprep.mubr.f32.mxu0 0.0
        %646 = vmatmul.mubr.f32.gmra.mxu0 %v432
        %v647 = vpop.f32.mrf.mxu0
        %v648 = vadd.f32 0.0, %v647
        %v649 = vpop.f32.mrf.mxu0
        %650 = vmatprep.mubr.f32.mxu0 0.0
        %651 = vmatmul.mubr.f32.gmra.mxu0 %v435
        %v652 = vpop.f32.mrf.mxu0
        %v653 = vadd.f32 0.0, %v652
        %v654 = vpop.f32.mrf.mxu0
        %655 = vmatprep.mubr.f32.mxu0 0.0
        %656 = vmatmul.mubr.f32.gmra.mxu0 %v438
        %v657 = vpop.f32.mrf.mxu0
        %v658 = vadd.f32 0.0, %v657
        %v659 = vpop.f32.mrf.mxu0
        %660 = vmatprep.mubr.f32.mxu0 0.0
        %661 = vmatmul.mubr.f32.gmra.mxu0 %v441
        %v662 = vpop.f32.mrf.mxu0
        %v663 = vadd.f32 0.0, %v662
        %v664 = vpop.f32.mrf.mxu0
        %665 = vmatprep.mubr.f32.mxu0 0.0
        %666 = vmatmul.mubr.f32.gmra.mxu0 %v444
        %v667 = vpop.f32.mrf.mxu0
        %v668 = vadd.f32 0.0, %v667
        %v669 = vpop.f32.mrf.mxu0
        %670 = vmatprep.mubr.f32.mxu0 0.0
        %671 = vmatmul.mubr.f32.gmra.mxu0 %v447
        %v672 = vpop.f32.mrf.mxu0
        %v673 = vadd.f32 0.0, %v672
        %v674 = vpop.f32.mrf.mxu0
        %675 = vmatprep.mubr.f32.mxu0 0.0
        %676 = vmatmul.mubr.f32.gmra.mxu0 %v450
        %v677 = vpop.f32.mrf.mxu0
        %v678 = vadd.f32 0.0, %v677
        %v679 = vpop.f32.mrf.mxu0
        %680 = vdwg.mxu0
        %v681 = vadd.f32 %v287, %v523
        %v682 = vadd.f32 %v288, %v528
        %v683 = vadd.f32 %v289, %v533
        %v684 = vadd.f32 %v290, %v538
        %v685 = vadd.f32 %v291, %v543
        %v686 = vadd.f32 %v292, %v548
        %v687 = vadd.f32 %v293, %v553
        %v688 = vadd.f32 %v294, %v558
        %v689 = vadd.f32 %v295, %v563
        %v690 = vadd.f32 %v296, %v568
        %v691 = vadd.f32 %v297, %v573
        %v692 = vadd.f32 %v298, %v578
        %v693 = vadd.f32 %v299, %v583
        %v694 = vadd.f32 %v300, %v588
        %v695 = vadd.f32 %v301, %v593
        %v696 = vadd.f32 %v302, %v598
        %v697 = vadd.f32 %v303, %v603
        %v698 = vadd.f32 %v304, %v608
        %v699 = vadd.f32 %v305, %v613
        %v700 = vadd.f32 %v306, %v618
        %v701 = vadd.f32 %v307, %v623
        %v702 = vadd.f32 %v308, %v628
        %v703 = vadd.f32 %v309, %v633
        %v704 = vadd.f32 %v310, %v638
        %v705 = vadd.f32 %v311, %v643
        %v706 = vadd.f32 %v312, %v648
        %v707 = vadd.f32 %v313, %v653
        %v708 = vadd.f32 %v314, %v658
        %v709 = vadd.f32 %v315, %v663
        %v710 = vadd.f32 %v316, %v668
        %v711 = vadd.f32 %v317, %v673
        %v712 = vadd.f32 %v318, %v678
        %713 = vst [vmem:[#allocation2] sm:$0xff] %v681
        %714 = vst [vmem:[#allocation2 + $0x8] sm:$0xff] %v682
        %715 = vst [vmem:[#allocation2 + $0x10] sm:$0xff] %v683
        %716 = vst [vmem:[#allocation2 + $0x18] sm:$0xff] %v684
        %717 = vst [vmem:[#allocation2 + $0x20] sm:$0xff] %v685
        %718 = vst [vmem:[#allocation2 + $0x28] sm:$0xff] %v686
        %719 = vst [vmem:[#allocation2 + $0x30] sm:$0xff] %v687
        %720 = vst [vmem:[#allocation2 + $0x38] sm:$0xff] %v688
        %721 = vst [vmem:[#allocation2 + $0x40] sm:$0xff] %v689
        %722 = vst [vmem:[#allocation2 + $0x48] sm:$0xff] %v690
        %723 = vst [vmem:[#allocation2 + $0x50] sm:$0xff] %v691
        %724 = vst [vmem:[#allocation2 + $0x58] sm:$0xff] %v692
        %725 = vst [vmem:[#allocation2 + $0x60] sm:$0xff] %v693
        %726 = vst [vmem:[#allocation2 + $0x68] sm:$0xff] %v694
        %727 = vst [vmem:[#allocation2 + $0x70] sm:$0xff] %v695
        %728 = vst [vmem:[#allocation2 + $0x78] sm:$0xff] %v696
        %729 = vst [vmem:[#allocation2 + $0x80] sm:$0xff] %v697
        %730 = vst [vmem:[#allocation2 + $0x88] sm:$0xff] %v698
        %731 = vst [vmem:[#allocation2 + $0x90] sm:$0xff] %v699
        %732 = vst [vmem:[#allocation2 + $0x98] sm:$0xff] %v700
        %733 = vst [vmem:[#allocation2 + $0xa0] sm:$0xff] %v701
        %734 = vst [vmem:[#allocation2 + $0xa8] sm:$0xff] %v702
        %735 = vst [vmem:[#allocation2 + $0xb0] sm:$0xff] %v703
        %736 = vst [vmem:[#allocation2 + $0xb8] sm:$0xff] %v704
        %737 = vst [vmem:[#allocation2 + $0xc0] sm:$0xff] %v705
        %738 = vst [vmem:[#allocation2 + $0xc8] sm:$0xff] %v706
        %739 = vst [vmem:[#allocation2 + $0xd0] sm:$0xff] %v707
        %740 = vst [vmem:[#allocation2 + $0xd8] sm:$0xff] %v708
        %741 = vst [vmem:[#allocation2 + $0xe0] sm:$0xff] %v709
        %742 = vst [vmem:[#allocation2 + $0xe8] sm:$0xff] %v710
        %743 = vst [vmem:[#allocation2 + $0xf0] sm:$0xff] %v711
        %744 = vst [vmem:[#allocation2 + $0xf8] sm:$0xff] %v712
        // Predicated region
        $region37: #{tpu_custom_call.1} parent=31 // pred_check
          %p745 = pneg %p251
        $region38: #{tpu_custom_call.1} parent=31 // pred_check_branch
          %747 = sbr.rel (%p745) target = $region40
        $region39: #{tpu_custom_call.1} parent=31 // pred_region
          %v748 = vld [vmem:[#allocation2] sm:$0xff]
          %v749 = vld [vmem:[#allocation2 + $0x8] sm:$0xff]
          %v750 = vld [vmem:[#allocation2 + $0x10] sm:$0xff]
          %v751 = vld [vmem:[#allocation2 + $0x18] sm:$0xff]
          %v752 = vld [vmem:[#allocation2 + $0x20] sm:$0xff]
          %v753 = vld [vmem:[#allocation2 + $0x28] sm:$0xff]
          %v754 = vld [vmem:[#allocation2 + $0x30] sm:$0xff]
          %v755 = vld [vmem:[#allocation2 + $0x38] sm:$0xff]
          %v756 = vld [vmem:[#allocation2 + $0x40] sm:$0xff]
          %v757 = vld [vmem:[#allocation2 + $0x48] sm:$0xff]
          %v758 = vld [vmem:[#allocation2 + $0x50] sm:$0xff]
          %v759 = vld [vmem:[#allocation2 + $0x58] sm:$0xff]
          %v760 = vld [vmem:[#allocation2 + $0x60] sm:$0xff]
          %v761 = vld [vmem:[#allocation2 + $0x68] sm:$0xff]
          %v762 = vld [vmem:[#allocation2 + $0x70] sm:$0xff]
          %v763 = vld [vmem:[#allocation2 + $0x78] sm:$0xff]
          %v764 = vld [vmem:[#allocation2 + $0x80] sm:$0xff]
          %v765 = vld [vmem:[#allocation2 + $0x88] sm:$0xff]
          %v766 = vld [vmem:[#allocation2 + $0x90] sm:$0xff]
          %v767 = vld [vmem:[#allocation2 + $0x98] sm:$0xff]
          %v768 = vld [vmem:[#allocation2 + $0xa0] sm:$0xff]
          %v769 = vld [vmem:[#allocation2 + $0xa8] sm:$0xff]
          %v770 = vld [vmem:[#allocation2 + $0xb0] sm:$0xff]
          %v771 = vld [vmem:[#allocation2 + $0xb8] sm:$0xff]
          %v772 = vld [vmem:[#allocation2 + $0xc0] sm:$0xff]
          %v773 = vld [vmem:[#allocation2 + $0xc8] sm:$0xff]
          %v774 = vld [vmem:[#allocation2 + $0xd0] sm:$0xff]
          %v775 = vld [vmem:[#allocation2 + $0xd8] sm:$0xff]
          %v776 = vld [vmem:[#allocation2 + $0xe0] sm:$0xff]
          %v777 = vld [vmem:[#allocation2 + $0xe8] sm:$0xff]
          %v778 = vld [vmem:[#allocation2 + $0xf0] sm:$0xff]
          %v779 = vld [vmem:[#allocation2 + $0xf8] sm:$0xff]
          %v780 = vld [vmem:[%s249] sm:$0x1]
          %v782 = vlaneseq
          %v783 = vshrl.u32 %v782, 7
          %v784 = vsub.s32 0, %v783
          %v785 = vrot.slane %v780, %v784
          %v787 = vadd.f32 %v748, %v785
          %v788 = vadd.f32 %v749, %v785
          %v789 = vadd.f32 %v750, %v785
          %v790 = vadd.f32 %v751, %v785
          %v791 = vadd.f32 %v752, %v785
          %v792 = vadd.f32 %v753, %v785
          %v793 = vadd.f32 %v754, %v785
          %v794 = vadd.f32 %v755, %v785
          %v795 = vadd.f32 %v756, %v785
          %v796 = vadd.f32 %v757, %v785
          %v797 = vadd.f32 %v758, %v785
          %v798 = vadd.f32 %v759, %v785
          %v799 = vadd.f32 %v760, %v785
          %v800 = vadd.f32 %v761, %v785
          %v801 = vadd.f32 %v762, %v785
          %v802 = vadd.f32 %v763, %v785
          %v803 = vadd.f32 %v764, %v785
          %v804 = vadd.f32 %v765, %v785
          %v805 = vadd.f32 %v766, %v785
          %v806 = vadd.f32 %v767, %v785
          %v807 = vadd.f32 %v768, %v785
          %v808 = vadd.f32 %v769, %v785
          %v809 = vadd.f32 %v770, %v785
          %v810 = vadd.f32 %v771, %v785
          %v811 = vadd.f32 %v772, %v785
          %v812 = vadd.f32 %v773, %v785
          %v813 = vadd.f32 %v774, %v785
          %v814 = vadd.f32 %v775, %v785
          %v815 = vadd.f32 %v776, %v785
          %v816 = vadd.f32 %v777, %v785
          %v817 = vadd.f32 %v778, %v785
          %v818 = vadd.f32 %v779, %v785
          %vm819 = vcmp.ge.f32.partialorder %v787, 0.05811413
          %vm820 = vcmp.ge.f32.partialorder %v788, 0.05811413
          %vm821 = vcmp.ge.f32.partialorder %v789, 0.05811413
          %vm822 = vcmp.ge.f32.partialorder %v790, 0.05811413
          %vm823 = vcmp.ge.f32.partialorder %v791, 0.05811413
          %vm824 = vcmp.ge.f32.partialorder %v792, 0.05811413
          %vm825 = vcmp.ge.f32.partialorder %v793, 0.05811413
          %vm826 = vcmp.ge.f32.partialorder %v794, 0.05811413
          %vm827 = vcmp.ge.f32.partialorder %v795, 0.05811413
          %vm828 = vcmp.ge.f32.partialorder %v796, 0.05811413
          %vm829 = vcmp.ge.f32.partialorder %v797, 0.05811413
          %vm830 = vcmp.ge.f32.partialorder %v798, 0.05811413
          %vm831 = vcmp.ge.f32.partialorder %v799, 0.05811413
          %vm832 = vcmp.ge.f32.partialorder %v800, 0.05811413
          %vm833 = vcmp.ge.f32.partialorder %v801, 0.05811413
          %vm834 = vcmp.ge.f32.partialorder %v802, 0.05811413
          %vm835 = vcmp.ge.f32.partialorder %v803, 0.05811413
          %vm836 = vcmp.ge.f32.partialorder %v804, 0.05811413
          %vm837 = vcmp.ge.f32.partialorder %v805, 0.05811413
          %vm838 = vcmp.ge.f32.partialorder %v806, 0.05811413
          %vm839 = vcmp.ge.f32.partialorder %v807, 0.05811413
          %vm840 = vcmp.ge.f32.partialorder %v808, 0.05811413
          %vm841 = vcmp.ge.f32.partialorder %v809, 0.05811413
          %vm842 = vcmp.ge.f32.partialorder %v810, 0.05811413
          %vm843 = vcmp.ge.f32.partialorder %v811, 0.05811413
          %vm844 = vcmp.ge.f32.partialorder %v812, 0.05811413
          %vm845 = vcmp.ge.f32.partialorder %v813, 0.05811413
          %vm846 = vcmp.ge.f32.partialorder %v814, 0.05811413
          %vm847 = vcmp.ge.f32.partialorder %v815, 0.05811413
          %vm848 = vcmp.ge.f32.partialorder %v816, 0.05811413
          %vm849 = vcmp.ge.f32.partialorder %v817, 0.05811413
          %vm850 = vcmp.ge.f32.partialorder %v818, 0.05811413
          %v851 = vsel %vm819, 1.0, 0.0
          %v852 = vsel %vm820, 1.0, 0.0
          %v853 = vsel %vm821, 1.0, 0.0
          %v854 = vsel %vm822, 1.0, 0.0
          %v855 = vsel %vm823, 1.0, 0.0
          %v856 = vsel %vm824, 1.0, 0.0
          %v857 = vsel %vm825, 1.0, 0.0
          %v858 = vsel %vm826, 1.0, 0.0
          %v859 = vsel %vm827, 1.0, 0.0
          %v860 = vsel %vm828, 1.0, 0.0
          %v861 = vsel %vm829, 1.0, 0.0
          %v862 = vsel %vm830, 1.0, 0.0
          %v863 = vsel %vm831, 1.0, 0.0
          %v864 = vsel %vm832, 1.0, 0.0
          %v865 = vsel %vm833, 1.0, 0.0
          %v866 = vsel %vm834, 1.0, 0.0
          %v867 = vsel %vm835, 1.0, 0.0
          %v868 = vsel %vm836, 1.0, 0.0
          %v869 = vsel %vm837, 1.0, 0.0
          %v870 = vsel %vm838, 1.0, 0.0
          %v871 = vsel %vm839, 1.0, 0.0
          %v872 = vsel %vm840, 1.0, 0.0
          %v873 = vsel %vm841, 1.0, 0.0
          %v874 = vsel %vm842, 1.0, 0.0
          %v875 = vsel %vm843, 1.0, 0.0
          %v876 = vsel %vm844, 1.0, 0.0
          %v877 = vsel %vm845, 1.0, 0.0
          %v878 = vsel %vm846, 1.0, 0.0
          %v879 = vsel %vm847, 1.0, 0.0
          %v880 = vsel %vm848, 1.0, 0.0
          %v881 = vsel %vm849, 1.0, 0.0
          %v882 = vsel %vm850, 1.0, 0.0
          %883 = vst [vmem:[%s228] sm:$0xff] %v851
          %884 = vst [vmem:[%s228 + $0x8] sm:$0xff] %v852
          %885 = vst [vmem:[%s228 + $0x10] sm:$0xff] %v853
          %886 = vst [vmem:[%s228 + $0x18] sm:$0xff] %v854
          %887 = vst [vmem:[%s228 + $0x20] sm:$0xff] %v855
          %888 = vst [vmem:[%s228 + $0x28] sm:$0xff] %v856
          %889 = vst [vmem:[%s228 + $0x30] sm:$0xff] %v857
          %890 = vst [vmem:[%s228 + $0x38] sm:$0xff] %v858
          %891 = vst [vmem:[%s228 + $0x40] sm:$0xff] %v859
          %892 = vst [vmem:[%s228 + $0x48] sm:$0xff] %v860
          %893 = vst [vmem:[%s228 + $0x50] sm:$0xff] %v861
          %894 = vst [vmem:[%s228 + $0x58] sm:$0xff] %v862
          %895 = vst [vmem:[%s228 + $0x60] sm:$0xff] %v863
          %896 = vst [vmem:[%s228 + $0x68] sm:$0xff] %v864
          %897 = vst [vmem:[%s228 + $0x70] sm:$0xff] %v865
          %898 = vst [vmem:[%s228 + $0x78] sm:$0xff] %v866
          %899 = vst [vmem:[%s228 + $0x80] sm:$0xff] %v867
          %900 = vst [vmem:[%s228 + $0x88] sm:$0xff] %v868
          %901 = vst [vmem:[%s228 + $0x90] sm:$0xff] %v869
          %902 = vst [vmem:[%s228 + $0x98] sm:$0xff] %v870
          %903 = vst [vmem:[%s228 + $0xa0] sm:$0xff] %v871
          %904 = vst [vmem:[%s228 + $0xa8] sm:$0xff] %v872
          %905 = vst [vmem:[%s228 + $0xb0] sm:$0xff] %v873
          %906 = vst [vmem:[%s228 + $0xb8] sm:$0xff] %v874
          %907 = vst [vmem:[%s228 + $0xc0] sm:$0xff] %v875
          %908 = vst [vmem:[%s228 + $0xc8] sm:$0xff] %v876
          %909 = vst [vmem:[%s228 + $0xd0] sm:$0xff] %v877
          %910 = vst [vmem:[%s228 + $0xd8] sm:$0xff] %v878
          %911 = vst [vmem:[%s228 + $0xe0] sm:$0xff] %v879
          %912 = vst [vmem:[%s228 + $0xe8] sm:$0xff] %v880
          %913 = vst [vmem:[%s228 + $0xf0] sm:$0xff] %v881
          %914 = vst [vmem:[%s228 + $0xf8] sm:$0xff] %v882
        $region40: #{tpu_custom_call.1} parent=31 // pred_fallthru
          _
        %s915 = sand.u32 %s128, 1
        %s916 = scalar_lea.sflag [#allocation4], %s915
        %s917 = sand.u32 %s128, 1
        %s918 = smul.addr %s917, 256
        %s919 = scalar_lea.vmem [#allocation3], %s918
        // Predicated region
        $region41: #{tpu_custom_call.1} parent=31 // pred_check
          %p920 = pneg %p138
        $region42: #{tpu_custom_call.1} parent=31 // pred_check_branch
          %922 = sbr.rel (%p920) target = $region44
        $region43: #{tpu_custom_call.1} parent=31 // pred_region
          %s923 = smul.u32 32, %s22
          %s925 = ssub.s32 4096, 4096
          %926 = vsyncadd %s916, %s925
          %s927 = sadd.s32 %s23, %s923
          %s928 = smul.addr %s927, 128
          %s929 = scalar_lea.hbm %s3, %s928
          %s930 = sshll.u32 %s919, 4
          %s931 = int_to_ptr.vmem [resolvable:$true] %s930
          %936 = dma.vmem_to_hbm [thread:$0]  %s931, 4096, %s929, %s916, 128, 128, 8
        $region44: #{tpu_custom_call.1} parent=31 // pred_fallthru
          _
      $region32: #{tpu_custom_call.1} parent=5 // pred_fallthru
        _
      %p937 = scmp.le.s32.totalorder 2, %s12
      // Predicated region
      $region45: #{tpu_custom_call.1} parent=5 // pred_check
        %p938 = pneg %p937
      $region46: #{tpu_custom_call.1} parent=5 // pred_check_branch
        %940 = sbr.rel (%p938) target = $region48
      $region47: #{tpu_custom_call.1} parent=5 // pred_region
        %s941 = ssub.s32 %s12, 2
        // Predicated region
        $region49: #{tpu_custom_call.1} parent=47 // pred_check
          %p942 = pneg %p144
        $region50: #{tpu_custom_call.1} parent=47 // pred_check_branch
          %944 = sbr.rel (%p942) target = $region52
        $region51: #{tpu_custom_call.1} parent=47 // pred_region
          %s945 = sand.u32 %s129, 1
          %s946 = scalar_lea.sflag [#allocation4], %s945
          %s947 = sand.u32 %s129, 1
          %s948 = smul.addr %s947, 256
          %s949 = scalar_lea.vmem [#allocation3], %s948
          %950 = dma.done %s946, 4096
        $region52: #{tpu_custom_call.1} parent=47 // pred_fallthru
          _
      $region48: #{tpu_custom_call.1} parent=5 // pred_fallthru
        _
    $region6: #{tpu_custom_call.1} parent=1 // loop_footer
      %s16 = sadd.s32 1, %s12
    $region7: #{tpu_custom_call.1} parent=1 // loop_footer_branch
      %11 = sbr.rel target = $region3
    $region8: #{tpu_custom_call.1} parent=1 // loop_exit
      _
    %951 = vsyncpa [#allocation4], 1
    %s952 = scalar_lea.sflag [#allocation4], 1
    %953 = vsyncpa %s952, 1

</llo_original>
